<compile_context>
chip_gen: v7x
topology: tpu7x:2x2x1
jax: 0.10.0
libtpu: 0.0.40
codegen_flags: <defaults>
</compile_context>

<pallas_src>
import functools
import math

import jax
import jax.numpy as jnp
from jax import lax
from jax.experimental import pallas as pl
from jax.experimental.pallas import tpu as pltpu


# ----------------------------- kernels --------------------------------------


def _swlinear_kernel(x_ref, w_ref, o_ref, acc_ref):
    # x_ref : (tm, tk) input tile
    # w_ref : (tn, tk) weight tile in native (out_features, in_features) layout
    # o_ref : (tm, tn) output tile
    # acc_ref: (tm, tn) f32 accumulator, persists across the K grid axis
    k = pl.program_id(2)

    @pl.when(k == 0)
    def _():
        acc_ref[...] = jnp.zeros_like(acc_ref)

    acc_ref[...] += lax.dot_general(
        x_ref[...], w_ref[...],
        dimension_numbers=(((1,), (1,)), ((), ())),   # contract K of both: x @ w.T
        preferred_element_type=jnp.float32)           # MXU, f32 accumulate

    @pl.when(k == pl.num_programs(2) - 1)
    def _():
        o_ref[...] = acc_ref[...].astype(o_ref.dtype)  # one lane-dense store


def _swlinear_bias_kernel(x_ref, w_ref, b_ref, o_ref, acc_ref):
    # Same as above, plus a (1, tn) f32 bias added at finalize time.
    k = pl.program_id(2)

    @pl.when(k == 0)
    def _():
        acc_ref[...] = jnp.zeros_like(acc_ref)

    acc_ref[...] += lax.dot_general(
        x_ref[...], w_ref[...],
        dimension_numbers=(((1,), (1,)), ((), ())),
        preferred_element_type=jnp.float32)

    @pl.when(k == pl.num_programs(2) - 1)
    def _():
        o_ref[...] = (acc_ref[...] + b_ref[...]).astype(o_ref.dtype)


# ----------------------------- wrapper ---------------------------------------


def _round_up(v, m):
    return -(-v // m) * m


def _largest_divisor_tile(dim, pref):
    """Largest tile <= pref that divides dim (dim is pre-padded appropriately)."""
    if dim <= pref:
        return dim
    t = pref
    while dim % t:
        t //= 2
    return t


def _is_multi_tensorcore():
    # v7x-class chips have 2 TensorCores per chip; v5e/v6e have 1 (grid steps
    # are a sequential loop there, so splitting small M is pure overhead).
    try:
        kind = jax.devices()[0].device_kind.lower()
    except Exception:
        return False
    return "v7" in kind


def swlinear_forward(x, weight, bias=None, *, compute_dtype=None):
    """x: (..., in_f), weight: (out_f, in_f), bias: (out_f,) or None -> (..., out_f)."""
    *lead, in_f = x.shape
    out_f, in_f_w = weight.shape
    assert in_f_w == in_f, "weight must be (out_features, in_features)"

    out_dtype = x.dtype
    in_dtype = jnp.dtype(compute_dtype) if compute_dtype is not None else jnp.dtype(x.dtype)

    M = int(math.prod(lead)) if lead else 1
    sub = 16 if in_dtype.itemsize == 2 else 8          # sublane tile (bf16 packs 2x)

    # ---- wrapper-side cast (once) + padding to hardware-friendly shapes ----
    x2 = x.reshape(M, in_f).astype(in_dtype)           # fuse batch/seq into one matmul
    w2 = weight.astype(in_dtype)                       # native (out_f, in_f): no transpose

    Np = _round_up(out_f, 128)                         # lane-dense output columns
    tile_k = in_f > 512                                # only tile K at production sizes
    Kp = _round_up(in_f, 128) if tile_k else in_f
    Mp = _round_up(M, sub)

    if Mp != M:
        x2 = jnp.pad(x2, ((0, Mp - M), (0, 0)))
    if Kp != in_f:
        x2 = jnp.pad(x2, ((0, 0), (0, Kp - in_f)))
    if (Np != out_f) or (Kp != in_f):
        w2 = jnp.pad(w2, ((0, Np - out_f), (0, Kp - in_f)))
    if bias is not None:
        b2 = bias.astype(jnp.float32)                  # bias added in f32 at finalize
        if Np != out_f:
            b2 = jnp.pad(b2, (0, Np - out_f))
        b2 = b2.reshape(1, Np)

    # ---- tile selection (generation-gated) ----
    tn = _largest_divisor_tile(Np, 256)                # MXU-native width on v6e/v7x
    tk = _largest_divisor_tile(Kp, 512) if tile_k else Kp
    if Mp > 512:
        tm = _largest_divisor_tile(Mp, 256)            # large-M: 256-row tiles
    elif _is_multi_tensorcore() and Mp >= 256 and Mp % (2 * sub) == 0:
        tm = Mp // 2                                   # megacore 2-way row split
    else:
        tm = Mp                                        # single row block (small M)

    grid_m, grid_n, grid_k = Mp // tm, Np // tn, Kp // tk

    # Grid-invariant weight/bias (row-only grid): single buffer, stays resident.
    w_resident = (grid_n == 1 and grid_k == 1 and grid_m > 1)
    resident_mode = dict(pipeline_mode=pl.Buffered(1)) if w_resident else {}

    x_spec = pl.BlockSpec((tm, tk), lambda i, j, k: (i, k))
    w_spec = pl.BlockSpec((tn, tk), lambda i, j, k: (j, k), **resident_mode)
    o_spec = pl.BlockSpec((tm, tn), lambda i, j, k: (i, j))
    scratch = [pltpu.VMEM((tm, tn), jnp.float32)]

    if bias is None:
        kernel = _swlinear_kernel
        in_specs = [x_spec, w_spec]
        args = (x2, w2)
    else:
        kernel = _swlinear_bias_kernel
        b_spec = pl.BlockSpec((1, tn), lambda i, j, k: (0, j), **resident_mode)
        in_specs = [x_spec, w_spec, b_spec]
        args = (x2, w2, b2)

    # ---- scheduler hint + explicit VMEM budget ----
    itm_in = in_dtype.itemsize
    itm_out = jnp.dtype(out_dtype).itemsize
    flops = 2 * Mp * Kp * Np
    bytes_accessed = (Mp * Kp + Np * Kp) * itm_in + Mp * Np * itm_out
    if bias is not None:
        bytes_accessed += Np * 4
    cost = pl.CostEstimate(flops=int(flops), transcendentals=0,
                           bytes_accessed=int(bytes_accessed))

    # working set: double-buffered in/out blocks + f32 accumulator (+bias)
    working = (2 * (tm * tk + tn * tk) * itm_in + 2 * tm * tn * itm_out
               + tm * tn * 4 + (2 * tn * 4 if bias is not None else 0))
    vmem_limit = int(min(48 * 1024 * 1024, max(8 * 1024 * 1024, 4 * working)))

    out2 = pl.pallas_call(
        kernel,
        out_shape=jax.ShapeDtypeStruct((Mp, Np), out_dtype),
        grid_spec=pltpu.PrefetchScalarGridSpec(
            num_scalar_prefetch=0,
            grid=(grid_m, grid_n, grid_k),
            in_specs=in_specs,
            out_specs=o_spec,
            scratch_shapes=scratch),
        compiler_params=pltpu.CompilerParams(
            dimension_semantics=("parallel", "parallel", "arbitrary"),
            vmem_limit_bytes=vmem_limit),
        cost_estimate=cost,
    )(*args)

    out2 = out2[:M, :out_f]                            # drop row / lane padding
    return out2.reshape(*lead, out_f)


def swlinear_reference(x, weight, bias=None):
    y = jnp.einsum("...i,oi->...o", x, weight)
    if bias is not None:
        y = y + bias
    return y


if __name__ == "__main__":
    # Small shapes consistent with mini-vit usage: (batch=2, seq=8, in=32) -> out=96.
    B, N, IN_F, OUT_F = 2, 8, 32, 96

    key = jax.random.PRNGKey(0)
    kx, kw, kb = jax.random.split(key, 3)

    x = jax.random.normal(kx, (B, N, IN_F), dtype=jnp.float32)

    # kaiming_uniform_(a=sqrt(5)) on (out_f, in_f): bound = 1 / sqrt(fan_in)
    bound = 1.0 / math.sqrt(IN_F)
    weight = jax.random.uniform(kw, (OUT_F, IN_F), dtype=jnp.float32,
                                minval=-bound, maxval=bound)
    bias = jax.random.uniform(kb, (OUT_F,), dtype=jnp.float32,
                              minval=-bound, maxval=bound)

    # 1) default module config (bias=None), full-precision compute.
    out = jax.block_until_ready(swlinear_forward(x, weight))
    ref = swlinear_reference(x, weight)
    assert out.shape == (B, N, OUT_F)
    assert jnp.allclose(out, ref, atol=1e-4, rtol=1e-4), "f32 mismatch vs reference"

    # 2) bias path + wrapper-side bf16 cast (f32 MXU accumulation), looser tolerance.
    out_b = jax.block_until_ready(
        swlinear_forward(x, weight, bias, compute_dtype=jnp.bfloat16))
    ref_b = swlinear_reference(x, weight, bias)
    assert jnp.allclose(out_b, ref_b, atol=3e-2, rtol=3e-2), "bf16 mismatch vs reference"

    print("KERNEL_OK")
</pallas_src>

<mosaic_0001>
module attributes {stable_mosaic.version = 11 : i64} {
  func.func @_swlinear_kernel(%arg0: i32, %arg1: i32, %arg2: i32, %arg3: memref<16x32xf32, #tpu.memory_space<vmem>>, %arg4: memref<128x32xf32, #tpu.memory_space<vmem>>, %arg5: memref<16x128xf32, #tpu.memory_space<vmem>>, %arg6: memref<16x128xf32, #tpu.memory_space<vmem>>) attributes {dimension_semantics = [#tpu.dimension_semantics<parallel>, #tpu.dimension_semantics<parallel>, #tpu.dimension_semantics<arbitrary>], iteration_bounds = array<i64: 1, 1, 1>, scalar_prefetch = 0 : i64, scratch_operands = 1 : i64, tpu.core_type = #tpu.core_type<tc>, window_params = [{transform_indices = @transform_0, window_bounds = array<i64: 16, 32>}, {transform_indices = @transform_1, window_bounds = array<i64: 128, 32>}, {transform_indices = @transform_2, window_bounds = array<i64: 16, 128>}]} {
    %c0_i32 = arith.constant 0 : i32
    %0 = arith.cmpi eq, %arg2, %c0_i32 : i32
    %1 = arith.extui %0 : i1 to i32
    %c0_i32_0 = arith.constant 0 : i32
    %2 = arith.cmpi ne, %1, %c0_i32_0 : i32
    scf.if %2 {
      %cst_10 = arith.constant 0.000000e+00 : f32
      %12 = vector.broadcast %cst_10 : f32 to vector<16x128xf32>
      %c0_11 = arith.constant 0 : index
      %c0_12 = arith.constant 0 : index
      %13 = vector.load %arg6[%c0_11, %c0_12] : memref<16x128xf32, #tpu.memory_space<vmem>>, vector<16x128xf32>
      tpu.vector_store %arg6[%c0_11, %c0_12], %12 {strides = array<i32>} : memref<16x128xf32, #tpu.memory_space<vmem>>, vector<16x128xf32>,
    } else {
    }
    %c0 = arith.constant 0 : index
    %c0_1 = arith.constant 0 : index
    %3 = vector.load %arg6[%c0, %c0_1] : memref<16x128xf32, #tpu.memory_space<vmem>>, vector<16x128xf32>
    %c0_2 = arith.constant 0 : index
    %c0_3 = arith.constant 0 : index
    %4 = vector.load %arg3[%c0_2, %c0_3] : memref<16x32xf32, #tpu.memory_space<vmem>>, vector<16x32xf32>
    %c0_4 = arith.constant 0 : index
    %c0_5 = arith.constant 0 : index
    %5 = vector.load %arg4[%c0_4, %c0_5] : memref<128x32xf32, #tpu.memory_space<vmem>>, vector<128x32xf32>
    %cst = arith.constant dense<0.000000e+00> : vector<16x128xf32>
    %6 = tpu.matmul %4, %5, %cst {dimension_numbers = #tpu.dot_dimension_numbers<[1], [1], [0], [0], [0, 0, 1, 0], [], []>} : vector<16x32xf32>, vector<128x32xf32>, vector<16x128xf32> -> vector<16x128xf32>
    %7 = arith.addf %3, %6 : vector<16x128xf32>
    %c0_6 = arith.constant 0 : index
    %c0_7 = arith.constant 0 : index
    %8 = vector.load %arg6[%c0_6, %c0_7] : memref<16x128xf32, #tpu.memory_space<vmem>>, vector<16x128xf32>
    tpu.vector_store %arg6[%c0_6, %c0_7], %7 {strides = array<i32>} : memref<16x128xf32, #tpu.memory_space<vmem>>, vector<16x128xf32>,
    %c0_i32_8 = arith.constant 0 : i32
    %9 = arith.cmpi eq, %arg2, %c0_i32_8 : i32
    %10 = arith.extui %9 : i1 to i32
    %c0_i32_9 = arith.constant 0 : i32
    %11 = arith.cmpi ne, %10, %c0_i32_9 : i32
    scf.if %11 {
      %c0_10 = arith.constant 0 : index
      %c0_11 = arith.constant 0 : index
      %12 = vector.load %arg6[%c0_10, %c0_11] : memref<16x128xf32, #tpu.memory_space<vmem>>, vector<16x128xf32>
      %c0_12 = arith.constant 0 : index
      %c0_13 = arith.constant 0 : index
      %13 = vector.load %arg5[%c0_12, %c0_13] : memref<16x128xf32, #tpu.memory_space<vmem>>, vector<16x128xf32>
      tpu.vector_store %arg5[%c0_12, %c0_13], %12 {strides = array<i32>} : memref<16x128xf32, #tpu.memory_space<vmem>>, vector<16x128xf32>,
    } else {
    }
    return
  }
  func.func @transform_0(%arg0: i32, %arg1: i32, %arg2: i32) -> (i32, i32) {
    %c0_i32 = arith.constant 0 : i32
    return %arg0, %arg2 : i32, i32
  }
  func.func @transform_1(%arg0: i32, %arg1: i32, %arg2: i32) -> (i32, i32) {
    %c0_i32 = arith.constant 0 : i32
    return %arg1, %arg2 : i32, i32
  }
  func.func @transform_2(%arg0: i32, %arg1: i32, %arg2: i32) -> (i32, i32) {
    %c0_i32 = arith.constant 0 : i32
    return %arg0, %arg1 : i32, i32
  }
}

</mosaic_0001>

<llo_original>
// kernel: tpu_custom_call.1
$region0: #{tpu_custom_call.1}
  #allocation0 [shape = 'u32[]', space=smem, size = 0x4, offset = 0x4, fixed_abs, tag = 'smem constant byte address 0x4 - core index']
  #allocation1 [shape = 'u32[144,128]{1,0:T(1,128)}', space=vmem, size = 0x12000, scoped, tag = 'internal scratch']
  #allocation2 [shape = 'f32[16,128]{1,0:T(8,128)}', space=vmem, size = 0x2000, scoped, tag = 'scratch operand']
  %s0 = inlined_call_operand.vmem [shape: f32[16,32], index: 0, kind: input, shape index: {}]
  %s1 = inlined_call_operand.vmem [shape: f32[128,32], index: 1, kind: input, shape index: {}]
  %s2 = inlined_call_operand.hbm [shape: f32[16,128], index: 2, kind: output, shape index: {}]
  %s3 = sld [smem:[#allocation0]]
  $region26: #{tpu_custom_call.1} parent=0
    _
  %s5 = ssub.s32 1, %s3
  %s6 = scalar_select 0, %s5, %s3
  $region1: #{tpu_custom_call.1} parent=0
    #allocation3 [shape = 'u8[8192]{0}', space=vmem, size = 0x2000, scoped, tag = 'output window, operand 0, single buffered']
    #allocation4 [shape = 's32[1]{0}', space=sflag, size = 0x4, scoped, tag = 'scoped memory for tpu_custom_call.1']
    %7 = vsyncpa [#allocation4], 0
    // Predicated region
    $region2: #{tpu_custom_call.1} parent=1 // pred_check
      _
    $region3: #{tpu_custom_call.1} parent=1 // pred_check_branch
      %9 = sbr.rel (0) target = $region5
    $region4: #{tpu_custom_call.1} parent=1 // pred_region
      _
    $region5: #{tpu_custom_call.1} parent=1 // pred_fallthru
      _
    // Predicated region
    $region6: #{tpu_custom_call.1} parent=1 // pred_check
      _
    $region7: #{tpu_custom_call.1} parent=1 // pred_check_branch
      %11 = sbr.rel (0) target = $region9
    $region8: #{tpu_custom_call.1} parent=1 // pred_region
      _
    $region9: #{tpu_custom_call.1} parent=1 // pred_fallthru
      _
    %p12 = scmp.eq.s32.totalorder 0, 0
    // Predicated region
    $region10: #{tpu_custom_call.1} parent=1 // pred_check
      %p13 = pneg %p12
    $region11: #{tpu_custom_call.1} parent=1 // pred_check_branch
      %15 = sbr.rel (%p13) target = $region13
    $region12: #{tpu_custom_call.1} parent=1 // pred_region
      %16 = vst [vmem:[#allocation2] sm:$0xff] 0.0
      %17 = vst [vmem:[#allocation2 + $0x8] sm:$0xff] 0.0
    $region13: #{tpu_custom_call.1} parent=1 // pred_fallthru
      _
    %v18 = vld [vmem:[#allocation2] sm:$0xff]
    %v19 = vld [vmem:[#allocation2 + $0x8] sm:$0xff]
    %v20 = vld [vmem:[%s0] sm:$0xff]
    %v21 = vld [vmem:[%s0 + $0x8] sm:$0xff]
    %v22 = vld [vmem:[%s1] sm:$0xff]
    %v23 = vld [vmem:[%s1 + $0x8] sm:$0xff]
    %v24 = vld [vmem:[%s1 + $0x10] sm:$0xff]
    %v25 = vld [vmem:[%s1 + $0x18] sm:$0xff]
    %v26 = vld [vmem:[%s1 + $0x20] sm:$0xff]
    %v27 = vld [vmem:[%s1 + $0x28] sm:$0xff]
    %v28 = vld [vmem:[%s1 + $0x30] sm:$0xff]
    %v29 = vld [vmem:[%s1 + $0x38] sm:$0xff]
    %v30 = vld [vmem:[%s1 + $0x40] sm:$0xff]
    %v31 = vld [vmem:[%s1 + $0x48] sm:$0xff]
    %v32 = vld [vmem:[%s1 + $0x50] sm:$0xff]
    %v33 = vld [vmem:[%s1 + $0x58] sm:$0xff]
    %v34 = vld [vmem:[%s1 + $0x60] sm:$0xff]
    %v35 = vld [vmem:[%s1 + $0x68] sm:$0xff]
    %v36 = vld [vmem:[%s1 + $0x70] sm:$0xff]
    %v37 = vld [vmem:[%s1 + $0x78] sm:$0xff]
    %vm38 = vcmask 261120
    %v40 = vsel %vm38, %v20, 0
    %v43 = vsel %vm38, %v21, 0
    %v46 = vsel %vm38, %v22, 0
    %v49 = vsel %vm38, %v23, 0
    %v52 = vsel %vm38, %v24, 0
    %v55 = vsel %vm38, %v25, 0
    %v58 = vsel %vm38, %v26, 0
    %v61 = vsel %vm38, %v27, 0
    %v64 = vsel %vm38, %v28, 0
    %v67 = vsel %vm38, %v29, 0
    %v70 = vsel %vm38, %v30, 0
    %v73 = vsel %vm38, %v31, 0
    %v76 = vsel %vm38, %v32, 0
    %v79 = vsel %vm38, %v33, 0
    %v82 = vsel %vm38, %v34, 0
    %v85 = vsel %vm38, %v35, 0
    %v88 = vsel %vm38, %v36, 0
    %v91 = vsel %vm38, %v37, 0
    %93 = vmatprep.subr.mxu0 0.0
    %94 = vmatpush1.xpose.msra.mxu0 %v46
    %95 = vmatprep.subr.mxu0 0.0
    %96 = vmatpush1.xpose.msra.mxu0 %v49
    %97 = vmatprep.subr.mxu0 0.0
    %98 = vmatpush1.xpose.msra.mxu0 %v52
    %99 = vmatprep.subr.mxu0 0.0
    %100 = vmatpush1.xpose.msra.mxu0 %v55
    %101 = vmatprep.subr.mxu0 0.0
    %102 = vmatpush1.xpose.msra.mxu0 %v58
    %103 = vmatprep.subr.mxu0 0.0
    %104 = vmatpush1.xpose.msra.mxu0 %v61
    %105 = vmatprep.subr.mxu0 0.0
    %106 = vmatpush1.xpose.msra.mxu0 %v64
    %107 = vmatprep.subr.mxu0 0.0
    %108 = vmatpush1.xpose.msra.mxu0 %v67
    %109 = vmatprep.subr.mxu0 0.0
    %110 = vmatpush1.xpose.msra.mxu0 %v70
    %111 = vmatprep.subr.mxu0 0.0
    %112 = vmatpush1.xpose.msra.mxu0 %v73
    %113 = vmatprep.subr.mxu0 0.0
    %114 = vmatpush1.xpose.msra.mxu0 %v76
    %115 = vmatprep.subr.mxu0 0.0
    %116 = vmatpush1.xpose.msra.mxu0 %v79
    %117 = vmatprep.subr.mxu0 0.0
    %118 = vmatpush1.xpose.msra.mxu0 %v82
    %119 = vmatprep.subr.mxu0 0.0
    %120 = vmatpush1.xpose.msra.mxu0 %v85
    %121 = vmatprep.subr.mxu0 0.0
    %122 = vmatpush1.xpose.msra.mxu0 %v88
    %123 = vmatprep.subr.mxu0 0.0
    %124 = vmatpush1.xpose.msra.mxu0 %v91
    %125 = vmatprep.subr.mxu0 0.0
    %126 = vmatpush1.xpose.msra.mxu0 0.0
    %127 = vmatprep.subr.mxu0 0.0
    %128 = vmatpush1.xpose.msra.mxu0 0.0
    %129 = vmatprep.subr.mxu0 0.0
    %130 = vmatpush1.xpose.msra.mxu0 0.0
    %131 = vmatprep.subr.mxu0 0.0
    %132 = vmatpush1.xpose.msra.mxu0 0.0
    %133 = vmatprep.subr.mxu0 0.0
    %134 = vmatpush1.xpose.msra.mxu0 0.0
    %135 = vmatprep.subr.mxu0 0.0
    %136 = vmatpush1.xpose.msra.mxu0 0.0
    %137 = vmatprep.subr.mxu0 0.0
    %138 = vmatpush1.xpose.msra.mxu0 0.0
    %139 = vmatprep.subr.mxu0 0.0
    %140 = vmatpush1.xpose.msra.mxu0 0.0
    %141 = vmatprep.subr.mxu0 0.0
    %142 = vmatpush1.xpose.msra.mxu0 0.0
    %143 = vmatprep.subr.mxu0 0.0
    %144 = vmatpush1.xpose.msra.mxu0 0.0
    %145 = vmatprep.subr.mxu0 0.0
    %146 = vmatpush1.xpose.msra.mxu0 0.0
    %147 = vmatprep.subr.mxu0 0.0
    %148 = vmatpush1.xpose.msra.mxu0 0.0
    %149 = vmatprep.subr.mxu0 0.0
    %150 = vmatpush1.xpose.msra.mxu0 0.0
    %151 = vmatprep.subr.mxu0 0.0
    %152 = vmatpush1.xpose.msra.mxu0 0.0
    %153 = vmatprep.subr.mxu0 0.0
    %154 = vmatpush1.xpose.msra.mxu0 0.0
    %155 = vmatprep.subr.mxu0 0.0
    %156 = vmatpush1.xpose.msra.mxu0 0.0
    %157 = vmatprep.mubr.f32.mxu0 0.0
    %158 = vmatmul.mubr.f32.gmra.mrb[0].mxu0 %v40
    %v159 = vpop.f32.mrb[0].mxu0
    %v160 = vadd.f32 0.0, %v159
    %v161 = vpop.f32.mrb[0].mxu0
    %162 = vmatprep.mubr.f32.mxu0 0.0
    %163 = vmatmul.mubr.f32.gmra.mrb[0].mxu0 %v43
    %v164 = vpop.f32.mrb[0].mxu0
    %v165 = vadd.f32 0.0, %v164
    %v166 = vpop.f32.mrb[0].mxu0
    %167 = vdwg.mxu0
    %v168 = vadd.f32 %v18, %v160
    %v169 = vadd.f32 %v19, %v165
    %170 = vst [vmem:[#allocation2] sm:$0xff] %v168
    %171 = vst [vmem:[#allocation2 + $0x8] sm:$0xff] %v169
    // Predicated region
    $region14: #{tpu_custom_call.1} parent=1 // pred_check
      %p172 = pneg %p12
    $region15: #{tpu_custom_call.1} parent=1 // pred_check_branch
      %174 = sbr.rel (%p172) target = $region17
    $region16: #{tpu_custom_call.1} parent=1 // pred_region
      %v175 = vld [vmem:[#allocation2] sm:$0xff]
      %v176 = vld [vmem:[#allocation2 + $0x8] sm:$0xff]
      %177 = vst [vmem:[#allocation3] sm:$0xff] %v175
      %178 = vst [vmem:[#allocation3 + $0x8] sm:$0xff] %v176
    $region17: #{tpu_custom_call.1} parent=1 // pred_fallthru
      _
    // Predicated region
    $region18: #{tpu_custom_call.1} parent=1 // pred_check
      _
    $region19: #{tpu_custom_call.1} parent=1 // pred_check_branch
      %180 = sbr.rel (0) target = $region21
    $region20: #{tpu_custom_call.1} parent=1 // pred_region
      %s182 = ssub.s32 256, 256
      %183 = vsyncadd [#allocation4], %s182
      %s184 = sshll.u32 [#allocation3], 4
      %s185 = int_to_ptr.vmem [resolvable:$true] %s184
      %190 = dma.vmem_to_hbm [thread:$0]  %s185, 256, %s2, [#allocation4], 128, 128, 8
    $region21: #{tpu_custom_call.1} parent=1 // pred_fallthru
      _
    // Predicated region
    $region22: #{tpu_custom_call.1} parent=1 // pred_check
      _
    $region23: #{tpu_custom_call.1} parent=1 // pred_check_branch
      %192 = sbr.rel (0) target = $region25
    $region24: #{tpu_custom_call.1} parent=1 // pred_region
      %193 = dma.done [#allocation4], 256
    $region25: #{tpu_custom_call.1} parent=1 // pred_fallthru
      _
    %194 = vsyncpa [#allocation4], 1

</llo_original>
